<compile_context>
chip_gen: v5e
topology: v5e:2x2
jax: 0.10.0
libtpu: 0.0.40
codegen_flags: <defaults>
</compile_context>

<pallas_src>
import jax
import jax.numpy as jnp
from jax import lax
from jax.experimental import pallas as pl
from jax.experimental.pallas import tpu as pltpu


def _qga_kernel(x_ref, xg_ref, wt_ref, bt_ref, wp_ref, bp_ref,
                z_ref, f_ref, phi_ref):
    # x_ref : (C,  TILE_P)   lane-dense spatial axis
    # xg_ref: (C,  Pg)
    # wt_ref/wp_ref: (Ci, C) pre-transposed 1x1-conv weights
    # bt_ref/bp_ref: (Ci, 1)
    # z_ref : (C,  TILE_P)
    # f_ref : (1,  TILE_P)
    # phi_ref (VMEM scratch): (Ci, Pg) f32 — computed once per batch (t == 0)
    t = pl.program_id(1)

    @pl.when(t == 0)
    def _():
        phi_ref[...] = (
            jnp.dot(wp_ref[...], xg_ref[...], preferred_element_type=jnp.float32)
            + bp_ref[...]
        )

    x = x_ref[...]                                                   # (C, TP)
    theta = (jnp.dot(wt_ref[...], x, preferred_element_type=jnp.float32)
             + bt_ref[...])                                          # (Ci, TP)

    # Scores, transposed so the P-tile lands in the lane dim: (Pg, TP).
    # Note: K = Ci is tiny here so the MXU is mostly padding; the kernel is
    # memory/store-slot bound anyway, so jnp/lax dot is kept for clarity.
    s = lax.dot_general(phi_ref[...], theta,
                        dimension_numbers=(((0,), (0,)), ((), ())),
                        preferred_element_type=jnp.float32)          # (Pg, TP)

    # max over guide positions, then scale (max(s)/N == max(s/N) since N > 0)
    pg = s.shape[0]
    fmax = jnp.max(s, axis=0, keepdims=True) * (1.0 / float(pg))     # (1, TP)

    z_ref[...] = (x * (1.0 + fmax)).astype(z_ref.dtype)              # z = x*f + x
    f_ref[...] = fmax


def _pick_tile_p(P, max_tile=1024):
    """Largest 128-multiple tile that divides P (<= max_tile); else the full P."""
    if P <= max_tile or P % 128 != 0:
        return P
    for cand in range(max_tile, 127, -128):
        if P % cand == 0:
            return cand
    return P


def query_guided_attention(x, x_g, w_theta, b_theta, w_phi, b_phi):
    """x, x_g: NCHW float32.  w_theta/w_phi: (C, Ci).  Returns (z: NCHW, f: (B, H, W))."""
    B, C, H, W = x.shape
    _, _, Hg, Wg = x_g.shape
    Ci = w_theta.shape[1]
    P = H * W
    Pg = Hg * Wg

    # channel-first, lane-dense spatial layout: pure reshapes, no transpose passes
    x_flat = x.reshape(B, C, P)
    xg_flat = x_g.reshape(B, C, Pg)
    wt_t = jnp.transpose(w_theta)          # (Ci, C) — tiny
    wp_t = jnp.transpose(w_phi)
    bt = b_theta.reshape(Ci, 1)
    bp = b_phi.reshape(Ci, 1)

    tile_p = _pick_tile_p(P)
    n_tiles = P // tile_p

    # rough VMEM budget: score temp + phi scratch + xg + double-buffered x/z/f tiles
    est = 4 * (Pg * tile_p            # (Pg, TILE_P) score intermediate
               + Ci * Pg              # phi scratch
               + 2 * C * Pg           # xg buffers
               + 4 * C * tile_p       # x + z double buffers
               + 2 * Ci * tile_p      # theta temp
               + 2 * tile_p)          # f
    vmem_limit = int(min(max(2 * est, 32 * 1024 * 1024), 64 * 1024 * 1024))

    grid_spec = pltpu.PrefetchScalarGridSpec(
        num_scalar_prefetch=0,
        grid=(B, n_tiles),
        in_specs=[
            pl.BlockSpec((None, C, tile_p), lambda b, t: (b, 0, t)),   # x tile
            pl.BlockSpec((None, C, Pg),     lambda b, t: (b, 0, 0)),   # x_g (re-DMA'd only when b changes)
            pl.BlockSpec((Ci, C),           lambda b, t: (0, 0)),      # theta weight^T
            pl.BlockSpec((Ci, 1),           lambda b, t: (0, 0)),      # theta bias
            pl.BlockSpec((Ci, C),           lambda b, t: (0, 0)),      # phi weight^T
            pl.BlockSpec((Ci, 1),           lambda b, t: (0, 0)),      # phi bias
        ],
        out_specs=[
            pl.BlockSpec((None, C, tile_p), lambda b, t: (b, 0, t)),   # z tile
            pl.BlockSpec((None, 1, tile_p), lambda b, t: (b, 0, t)),   # f tile (lane-dense)
        ],
        scratch_shapes=[pltpu.VMEM((Ci, Pg), jnp.float32)],            # phi, once per batch
    )

    z_flat, f_flat = pl.pallas_call(
        _qga_kernel,
        out_shape=(
            jax.ShapeDtypeStruct((B, C, P), x.dtype),
            jax.ShapeDtypeStruct((B, 1, P), jnp.float32),
        ),
        grid_spec=grid_spec,
        compiler_params=pltpu.CompilerParams(
            # batch is megacore-parallel; P-tile axis is "arbitrary" because tiles
            # t > 0 reuse the phi scratch written at t == 0 of the same batch.
            dimension_semantics=("parallel", "arbitrary"),
            vmem_limit_bytes=vmem_limit,
        ),
    )(x_flat, xg_flat, wt_t, bt, wp_t, bp)

    z = z_flat.reshape(B, C, H, W)
    f = f_flat.reshape(B, H, W)
    return z, f


def _reference(x, x_g, w_theta, b_theta, w_phi, b_phi):
    """Pure-JAX reference mirroring the PyTorch forward (attention='x', pyramid='no')."""
    B, C, H, W = x.shape
    Ci = w_theta.shape[1]
    theta = jnp.einsum('bchw,ci->bihw', x, w_theta) + b_theta[None, :, None, None]
    phi = jnp.einsum('bchw,ci->bihw', x_g, w_phi) + b_phi[None, :, None, None]
    theta_f = theta.reshape(B, Ci, -1).transpose(0, 2, 1)        # (B, P, Ci)
    phi_f = phi.reshape(B, Ci, -1)                               # (B, Ci, Pg)
    fmat = jnp.matmul(theta_f, phi_f)                            # (B, P, Pg)
    n = fmat.shape[-1]
    fdiv = fmat / n
    fm = jnp.max(fdiv, axis=2).reshape(B, H, W)
    z = x * fm[:, None] + x
    return z, fm


if __name__ == "__main__":
    key = jax.random.PRNGKey(0)
    k1, k2, k3, k4, k5, k6 = jax.random.split(key, 6)

    B, C, H, W = 2, 4, 16, 16
    Ci = max(C // 2, 1)   # inter_channels = in_channels // 2

    x = jax.random.normal(k1, (B, C, H, W), jnp.float32)
    x_g = jax.random.normal(k2, (B, C, H, W), jnp.float32)

    # deterministic synthetic 1x1-conv params (kernel-size-1 conv == dense over channels)
    w_theta = jax.random.normal(k3, (C, Ci), jnp.float32) * 0.1
    b_theta = jax.random.normal(k4, (Ci,), jnp.float32) * 0.1
    w_phi = jax.random.normal(k5, (C, Ci), jnp.float32) * 0.1
    b_phi = jax.random.normal(k6, (Ci,), jnp.float32) * 0.1

    z, f = query_guided_attention(x, x_g, w_theta, b_theta, w_phi, b_phi)
    jax.block_until_ready((z, f))

    z_ref, f_ref = _reference(x, x_g, w_theta, b_theta, w_phi, b_phi)
    assert z.shape == (B, C, H, W) and f.shape == (B, H, W)
    assert jnp.allclose(z, z_ref, atol=1e-4), float(jnp.max(jnp.abs(z - z_ref)))
    assert jnp.allclose(f, f_ref, atol=1e-5), float(jnp.max(jnp.abs(f - f_ref)))

    print("KERNEL_OK")
</pallas_src>

<mosaic_0001>
module attributes {stable_mosaic.version = 11 : i64} {
  func.func @_qga_kernel(%arg0: i32, %arg1: i32, %arg2: memref<1x4x256xf32, #tpu.memory_space<vmem>>, %arg3: memref<1x4x256xf32, #tpu.memory_space<vmem>>, %arg4: memref<2x4xf32, #tpu.memory_space<vmem>>, %arg5: memref<2x1xf32, #tpu.memory_space<vmem>>, %arg6: memref<2x4xf32, #tpu.memory_space<vmem>>, %arg7: memref<2x1xf32, #tpu.memory_space<vmem>>, %arg8: memref<1x4x256xf32, #tpu.memory_space<vmem>>, %arg9: memref<1x1x256xf32, #tpu.memory_space<vmem>>, %arg10: memref<2x256xf32, #tpu.memory_space<vmem>>) attributes {dimension_semantics = [#tpu.dimension_semantics<parallel>, #tpu.dimension_semantics<arbitrary>], iteration_bounds = array<i64: 2, 1>, scalar_prefetch = 0 : i64, scratch_operands = 1 : i64, tpu.core_type = #tpu.core_type<tc>, window_params = [{transform_indices = @transform_0, window_bounds = array<i64: 1, 4, 256>}, {transform_indices = @transform_1, window_bounds = array<i64: 1, 4, 256>}, {pipeline_mode = #tpu.pipeline_mode<synchronous>, transform_indices = @transform_2, window_bounds = array<i64: 2, 4>}, {pipeline_mode = #tpu.pipeline_mode<synchronous>, transform_indices = @transform_3, window_bounds = array<i64: 2, 1>}, {pipeline_mode = #tpu.pipeline_mode<synchronous>, transform_indices = @transform_4, window_bounds = array<i64: 2, 4>}, {pipeline_mode = #tpu.pipeline_mode<synchronous>, transform_indices = @transform_5, window_bounds = array<i64: 2, 1>}, {transform_indices = @transform_6, window_bounds = array<i64: 1, 4, 256>}, {transform_indices = @transform_7, window_bounds = array<i64: 1, 1, 256>}]} {
    %c0_i32 = arith.constant 0 : i32
    %0 = arith.cmpi eq, %arg1, %c0_i32 : i32
    %1 = arith.extui %0 : i1 to i32
    %c0_i32_0 = arith.constant 0 : i32
    %2 = arith.cmpi ne, %1, %c0_i32_0 : i32
    scf.if %2 {
      %c0_19 = arith.constant 0 : index
      %c0_20 = arith.constant 0 : index
      %26 = vector.load %arg6[%c0_19, %c0_20] : memref<2x4xf32, #tpu.memory_space<vmem>>, vector<2x4xf32>
      %c0_21 = arith.constant 0 : index
      %c0_22 = arith.constant 0 : index
      %c0_23 = arith.constant 0 : index
      %27 = vector.load %arg3[%c0_21, %c0_22, %c0_23] : memref<1x4x256xf32, #tpu.memory_space<vmem>>, vector<1x4x256xf32>
      %28 = vector.shape_cast %27 : vector<1x4x256xf32> to vector<4x256xf32>
      %cst_24 = arith.constant dense<0.000000e+00> : vector<2x256xf32>
      %29 = tpu.matmul %26, %28, %cst_24 {dimension_numbers = #tpu.dot_dimension_numbers<[1], [0], [0], [1], [0, 0, 1, 1], [], []>} : vector<2x4xf32>, vector<4x256xf32>, vector<2x256xf32> -> vector<2x256xf32>
      %c0_25 = arith.constant 0 : index
      %c0_26 = arith.constant 0 : index
      %30 = vector.load %arg7[%c0_25, %c0_26] : memref<2x1xf32, #tpu.memory_space<vmem>>, vector<2x1xf32>
      %31 = vector.broadcast %30 : vector<2x1xf32> to vector<2x256xf32>
      %32 = arith.addf %29, %31 : vector<2x256xf32>
      %c0_27 = arith.constant 0 : index
      %c0_28 = arith.constant 0 : index
      %33 = vector.load %arg10[%c0_27, %c0_28] : memref<2x256xf32, #tpu.memory_space<vmem>>, vector<2x256xf32>
      tpu.vector_store %arg10[%c0_27, %c0_28], %32 {strides = array<i32>} : memref<2x256xf32, #tpu.memory_space<vmem>>, vector<2x256xf32>,
    } else {
    }
    %c0 = arith.constant 0 : index
    %c0_1 = arith.constant 0 : index
    %c0_2 = arith.constant 0 : index
    %3 = vector.load %arg2[%c0, %c0_1, %c0_2] : memref<1x4x256xf32, #tpu.memory_space<vmem>>, vector<1x4x256xf32>
    %4 = vector.shape_cast %3 : vector<1x4x256xf32> to vector<4x256xf32>
    %c0_3 = arith.constant 0 : index
    %c0_4 = arith.constant 0 : index
    %5 = vector.load %arg4[%c0_3, %c0_4] : memref<2x4xf32, #tpu.memory_space<vmem>>, vector<2x4xf32>
    %cst = arith.constant dense<0.000000e+00> : vector<2x256xf32>
    %6 = tpu.matmul %5, %4, %cst {dimension_numbers = #tpu.dot_dimension_numbers<[1], [0], [0], [1], [0, 0, 1, 1], [], []>} : vector<2x4xf32>, vector<4x256xf32>, vector<2x256xf32> -> vector<2x256xf32>
    %c0_5 = arith.constant 0 : index
    %c0_6 = arith.constant 0 : index
    %7 = vector.load %arg5[%c0_5, %c0_6] : memref<2x1xf32, #tpu.memory_space<vmem>>, vector<2x1xf32>
    %8 = vector.broadcast %7 : vector<2x1xf32> to vector<2x256xf32>
    %9 = arith.addf %6, %8 : vector<2x256xf32>
    %c0_7 = arith.constant 0 : index
    %c0_8 = arith.constant 0 : index
    %10 = vector.load %arg10[%c0_7, %c0_8] : memref<2x256xf32, #tpu.memory_space<vmem>>, vector<2x256xf32>
    %cst_9 = arith.constant dense<0.000000e+00> : vector<256x256xf32>
    %11 = tpu.matmul %10, %9, %cst_9 {dimension_numbers = #tpu.dot_dimension_numbers<[0], [0], [1], [1], [0, 1, 1, 1], [], []>} : vector<2x256xf32>, vector<2x256xf32>, vector<256x256xf32> -> vector<256x256xf32>
    %cst_10 = arith.constant dense<0xFF800000> : vector<256xf32>
    %12 = vector.multi_reduction <maximumf>, %11, %cst_10 [0] : vector<256x256xf32> to vector<256xf32>
    %13 = vector.shape_cast %12 : vector<256xf32> to vector<1x256xf32>
    %cst_11 = arith.constant 3.906250e-03 : f32
    %14 = vector.broadcast %cst_11 : f32 to vector<1x256xf32>
    %15 = arith.mulf %13, %14 : vector<1x256xf32>
    %cst_12 = arith.constant 1.000000e+00 : f32
    %16 = vector.broadcast %cst_12 : f32 to vector<1x256xf32>
    %17 = arith.addf %16, %15 : vector<1x256xf32>
    %18 = vector.broadcast %17 : vector<1x256xf32> to vector<4x256xf32>
    %19 = arith.mulf %4, %18 : vector<4x256xf32>
    %c0_13 = arith.constant 0 : index
    %c0_14 = arith.constant 0 : index
    %c0_15 = arith.constant 0 : index
    %20 = vector.load %arg8[%c0_13, %c0_14, %c0_15] : memref<1x4x256xf32, #tpu.memory_space<vmem>>, vector<1x4x256xf32>
    %21 = vector.shape_cast %20 : vector<1x4x256xf32> to vector<4x256xf32>
    %22 = vector.shape_cast %19 : vector<4x256xf32> to vector<1x4x256xf32>
    tpu.vector_store %arg8[%c0_13, %c0_14, %c0_15], %22 {strides = array<i32>} : memref<1x4x256xf32, #tpu.memory_space<vmem>>, vector<1x4x256xf32>,
    %c0_16 = arith.constant 0 : index
    %c0_17 = arith.constant 0 : index
    %c0_18 = arith.constant 0 : index
    %23 = vector.load %arg9[%c0_16, %c0_17, %c0_18] : memref<1x1x256xf32, #tpu.memory_space<vmem>>, vector<1x1x256xf32>
    %24 = vector.shape_cast %23 : vector<1x1x256xf32> to vector<1x256xf32>
    %25 = vector.shape_cast %15 : vector<1x256xf32> to vector<1x1x256xf32>
    tpu.vector_store %arg9[%c0_16, %c0_17, %c0_18], %25 {strides = array<i32>} : memref<1x1x256xf32, #tpu.memory_space<vmem>>, vector<1x1x256xf32>,
    return
  }
  func.func @transform_0(%arg0: i32, %arg1: i32) -> (i32, i32, i32) {
    %c0_i32 = arith.constant 0 : i32
    %c0_i32_0 = arith.constant 0 : i32
    return %arg0, %c0_i32, %arg1 : i32, i32, i32
  }
  func.func @transform_1(%arg0: i32, %arg1: i32) -> (i32, i32, i32) {
    %c0_i32 = arith.constant 0 : i32
    %c0_i32_0 = arith.constant 0 : i32
    %c0_i32_1 = arith.constant 0 : i32
    return %arg0, %c0_i32, %c0_i32_0 : i32, i32, i32
  }
  func.func @transform_2(%arg0: i32, %arg1: i32) -> (i32, i32) {
    %c0_i32 = arith.constant 0 : i32
    %c0_i32_0 = arith.constant 0 : i32
    %c0_i32_1 = arith.constant 0 : i32
    return %c0_i32, %c0_i32_0 : i32, i32
  }
  func.func @transform_3(%arg0: i32, %arg1: i32) -> (i32, i32) {
    %c0_i32 = arith.constant 0 : i32
    %c0_i32_0 = arith.constant 0 : i32
    %c0_i32_1 = arith.constant 0 : i32
    return %c0_i32, %c0_i32_0 : i32, i32
  }
  func.func @transform_4(%arg0: i32, %arg1: i32) -> (i32, i32) {
    %c0_i32 = arith.constant 0 : i32
    %c0_i32_0 = arith.constant 0 : i32
    %c0_i32_1 = arith.constant 0 : i32
    return %c0_i32, %c0_i32_0 : i32, i32
  }
  func.func @transform_5(%arg0: i32, %arg1: i32) -> (i32, i32) {
    %c0_i32 = arith.constant 0 : i32
    %c0_i32_0 = arith.constant 0 : i32
    %c0_i32_1 = arith.constant 0 : i32
    return %c0_i32, %c0_i32_0 : i32, i32
  }
  func.func @transform_6(%arg0: i32, %arg1: i32) -> (i32, i32, i32) {
    %c0_i32 = arith.constant 0 : i32
    %c0_i32_0 = arith.constant 0 : i32
    return %arg0, %c0_i32, %arg1 : i32, i32, i32
  }
  func.func @transform_7(%arg0: i32, %arg1: i32) -> (i32, i32, i32) {
    %c0_i32 = arith.constant 0 : i32
    %c0_i32_0 = arith.constant 0 : i32
    return %arg0, %c0_i32, %arg1 : i32, i32, i32
  }
}

</mosaic_0001>

<llo_original>
// kernel: tpu_custom_call.1
$region0: #{tpu_custom_call.1}
  #allocation0 [shape = 'u32[]', space=smem, size = 0x4, offset = 0x4, fixed_abs, tag = 'smem constant byte address 0x4 - core index']
  #allocation1 [shape = 'u32[72,128]{1,0:T(1,128)}', space=vmem, size = 0x9000, scoped, tag = 'internal scratch']
  #allocation2 [shape = 'f32[2,256]{1,0:T(2,128)}', space=vmem, size = 0x800, scoped, tag = 'scratch operand']
  %s0 = inlined_call_operand.hbm [shape: f32[2,4,256], index: 0, kind: input, shape index: {}]
  %s1 = inlined_call_operand.hbm [shape: f32[2,4,256], index: 1, kind: input, shape index: {}]
  %s2 = inlined_call_operand.vmem [shape: f32[2,4], index: 2, kind: input, shape index: {}]
  %s3 = inlined_call_operand.vmem [shape: f32[2,1], index: 3, kind: input, shape index: {}]
  %s4 = inlined_call_operand.vmem [shape: f32[2,4], index: 4, kind: input, shape index: {}]
  %s5 = inlined_call_operand.vmem [shape: f32[2,1], index: 5, kind: input, shape index: {}]
  %s6 = inlined_call_operand.hbm [shape: f32[2,4,256], index: 6, kind: output, shape index: {0}]
  %s7 = inlined_call_operand.hbm [shape: f32[2,1,256], index: 7, kind: output, shape index: {1}]
  %8 = xla_tuple %s6, %s7
  %s9 = sld [smem:[#allocation0]]
  $region77: #{tpu_custom_call.1} parent=0
    _
  %s11 = ssub.s32 1, %s9
  %s12 = scalar_select 0, %s11, %s9
  $region1: #{tpu_custom_call.1} parent=0
    #allocation3 [shape = 'u8[8192]{0}', space=vmem, size = 0x2000, scoped, tag = 'input window, operand 0']
    #allocation4 [shape = 's32[2]{0}', space=sflag, size = 0x8, scoped, tag = 'scoped memory for tpu_custom_call.1']
    #allocation5 [shape = 's32[2]{0}', space=sflag, size = 0x8, scoped, tag = 'scoped memory for tpu_custom_call.1']
    #allocation6 [shape = 'u8[8192]{0}', space=vmem, size = 0x2000, scoped, tag = 'input window, operand 1']
    #allocation7 [shape = 's32[2]{0}', space=sflag, size = 0x8, scoped, tag = 'scoped memory for tpu_custom_call.1']
    #allocation8 [shape = 'u8[8192]{0}', space=vmem, size = 0x2000, scoped, tag = 'output window, operand 0']
    #allocation9 [shape = 'u8[2048]{0}', space=vmem, size = 0x800, scoped, tag = 'output window, operand 1']
    #allocation10 [shape = 's32[2]{0}', space=sflag, size = 0x8, scoped, tag = 'scoped memory for tpu_custom_call.1']
    %13 = vsyncpa [#allocation4], 0
    %s14 = scalar_lea.sflag [#allocation4], 1
    %15 = vsyncpa %s14, 0
    %16 = vsyncpa [#allocation7], 0
    %s17 = scalar_lea.sflag [#allocation7], 1
    %18 = vsyncpa %s17, 0
    %19 = vsyncpa [#allocation5], 0
    %s20 = scalar_lea.sflag [#allocation5], 1
    %21 = vsyncpa %s20, 0
    %22 = vsyncpa [#allocation10], 0
    %s23 = scalar_lea.sflag [#allocation10], 1
    %24 = vsyncpa %s23, 0
    loop: start=0, step=1, limit=4
    $region2: #{tpu_custom_call.1} parent=1 // loop_pre_header
      _
    $region3: #{tpu_custom_call.1} parent=1 // loop_header
      %s26 = sphi 0, %s30
      %p27 = scmp.ge.s32.totalorder %s26, 4
      %s33 = sphi 0, %s45
      %s34 = sphi 0, %s41
      %s35 = sphi 0, %s33
      %s36 = sphi 0, %s34
      %s37 = sphi 0, %s35
      %s38 = sphi 0, %s36
      %s50 = sphi 0, %s52
      %s53 = sphi 0, %s50
      %s54 = sphi 0, %s53
      %s70 = sphi 0, %s54
      %s76 = sphi 0, %s78
      %s79 = sphi 0, %s76
      %s80 = sphi 0, %s79
      %s96 = sphi 0, %s80
      %s100 = sphi 0, %s100
      %s102 = sphi 0, %s100
      %s103 = sphi 0, %s102
      %s117 = sphi 0, %s103
      %s121 = sphi 0, %s121
      %s123 = sphi 0, %s121
      %s124 = sphi 0, %s123
      %s138 = sphi 0, %s124
      %s142 = sphi 0, %s142
      %s144 = sphi 0, %s142
      %s145 = sphi 0, %s144
      %s159 = sphi 0, %s145
      %s163 = sphi 0, %s163
      %s165 = sphi 0, %s163
      %s166 = sphi 0, %s165
      %s180 = sphi 0, %s166
      %s188 = sphi 0, %s190
      %s191 = sphi 0, %s188
      %s192 = sphi 0, %s191
      %s208 = sphi 0, %s192
      %s216 = sphi 0, %s218
      %s219 = sphi 0, %s216
      %s220 = sphi 0, %s219
      %s236 = sphi 0, %s220
    $region4: #{tpu_custom_call.1} parent=1 // loop_header_branch
      %29 = sbr.rel (%p27) target = $region8
    $region5: #{tpu_custom_call.1} parent=1 // loop_body
      %s31 = ssub.s32 %s26, 1
      %s32 = ssub.s32 %s26, 2
      %s39 = sadd.s32 1, %s34
      %p40 = scmp.ge.s32.totalorder %s39, 1
      %s41 = scalar_select %p40, 0, %s39
      %s42 = sadd.s32 1, %s33
      %s43 = scalar_select %p40, %s42, %s33
      %p44 = scmp.ge.s32.totalorder %s43, 2
      %s45 = scalar_select %p44, 0, %s43
      %s46 = ssub.s32 %s33, %s45
      %s47 = ssub.s32 %s34, %s41
      %s48 = sor.u32 %s46, %s47
      %p49 = scmp.eq.s32.totalorder %s48, 0
      %s51 = sadd.s32 %s50, 1
      %s52 = scalar_select %p49, %s50, %s51
      %p55 = pneg %p49
      %p56 = scmp.eq.s32.totalorder %s26, 1
      %p57 = por %p55, %p56
      %p58 = scmp.ne.s32.totalorder %s50, %s53
      %p59 = scmp.eq.s32.totalorder %s26, 0
      %p60 = por %p58, %p59
      %p61 = scmp.ne.s32.totalorder %s50, %s53
      %p62 = scmp.eq.s32.totalorder %s31, 1
      %p63 = por %p61, %p62
      %p64 = scmp.ne.s32.totalorder %s53, %s54
      %p65 = scmp.eq.s32.totalorder %s31, 0
      %p66 = por %p64, %p65
      %p67 = scmp.ne.s32.totalorder %s53, %s54
      %p68 = scmp.eq.s32.totalorder %s32, 1
      %p69 = por %p67, %p68
      %p71 = scmp.ne.s32.totalorder %s54, %s70
      %p72 = scmp.eq.s32.totalorder %s32, 0
      %p73 = por %p71, %p72
      %s74 = ssub.s32 %s33, %s45
      %p75 = scmp.eq.s32.totalorder %s74, 0
      %s77 = sadd.s32 %s76, 1
      %s78 = scalar_select %p75, %s76, %s77
      %p81 = pneg %p75
      %p82 = scmp.eq.s32.totalorder %s26, 1
      %p83 = por %p81, %p82
      %p84 = scmp.ne.s32.totalorder %s76, %s79
      %p85 = scmp.eq.s32.totalorder %s26, 0
      %p86 = por %p84, %p85
      %p87 = scmp.ne.s32.totalorder %s76, %s79
      %p88 = scmp.eq.s32.totalorder %s31, 1
      %p89 = por %p87, %p88
      %p90 = scmp.ne.s32.totalorder %s79, %s80
      %p91 = scmp.eq.s32.totalorder %s31, 0
      %p92 = por %p90, %p91
      %p93 = scmp.ne.s32.totalorder %s79, %s80
      %p94 = scmp.eq.s32.totalorder %s32, 1
      %p95 = por %p93, %p94
      %p97 = scmp.ne.s32.totalorder %s80, %s96
      %p98 = scmp.eq.s32.totalorder %s32, 0
      %p99 = por %p97, %p98
      %s101 = sadd.s32 %s100, 1
      %p104 = scmp.eq.s32.totalorder %s26, 1
      %p105 = scmp.ne.s32.totalorder %s100, %s102
      %p106 = scmp.eq.s32.totalorder %s26, 0
      %p107 = por %p105, %p106
      %p108 = scmp.ne.s32.totalorder %s100, %s102
      %p109 = scmp.eq.s32.totalorder %s31, 1
      %p110 = por %p108, %p109
      %p111 = scmp.ne.s32.totalorder %s102, %s103
      %p112 = scmp.eq.s32.totalorder %s31, 0
      %p113 = por %p111, %p112
      %p114 = scmp.ne.s32.totalorder %s102, %s103
      %p115 = scmp.eq.s32.totalorder %s32, 1
      %p116 = por %p114, %p115
      %p118 = scmp.ne.s32.totalorder %s103, %s117
      %p119 = scmp.eq.s32.totalorder %s32, 0
      %p120 = por %p118, %p119
      %s122 = sadd.s32 %s121, 1
      %p125 = scmp.eq.s32.totalorder %s26, 1
      %p126 = scmp.ne.s32.totalorder %s121, %s123
      %p127 = scmp.eq.s32.totalorder %s26, 0
      %p128 = por %p126, %p127
      %p129 = scmp.ne.s32.totalorder %s121, %s123
      %p130 = scmp.eq.s32.totalorder %s31, 1
      %p131 = por %p129, %p130
      %p132 = scmp.ne.s32.totalorder %s123, %s124
      %p133 = scmp.eq.s32.totalorder %s31, 0
      %p134 = por %p132, %p133
      %p135 = scmp.ne.s32.totalorder %s123, %s124
      %p136 = scmp.eq.s32.totalorder %s32, 1
      %p137 = por %p135, %p136
      %p139 = scmp.ne.s32.totalorder %s124, %s138
      %p140 = scmp.eq.s32.totalorder %s32, 0
      %p141 = por %p139, %p140
      %s143 = sadd.s32 %s142, 1
      %p146 = scmp.eq.s32.totalorder %s26, 1
      %p147 = scmp.ne.s32.totalorder %s142, %s144
      %p148 = scmp.eq.s32.totalorder %s26, 0
      %p149 = por %p147, %p148
      %p150 = scmp.ne.s32.totalorder %s142, %s144
      %p151 = scmp.eq.s32.totalorder %s31, 1
      %p152 = por %p150, %p151
      %p153 = scmp.ne.s32.totalorder %s144, %s145
      %p154 = scmp.eq.s32.totalorder %s31, 0
      %p155 = por %p153, %p154
      %p156 = scmp.ne.s32.totalorder %s144, %s145
      %p157 = scmp.eq.s32.totalorder %s32, 1
      %p158 = por %p156, %p157
      %p160 = scmp.ne.s32.totalorder %s145, %s159
      %p161 = scmp.eq.s32.totalorder %s32, 0
      %p162 = por %p160, %p161
      %s164 = sadd.s32 %s163, 1
      %p167 = scmp.eq.s32.totalorder %s26, 1
      %p168 = scmp.ne.s32.totalorder %s163, %s165
      %p169 = scmp.eq.s32.totalorder %s26, 0
      %p170 = por %p168, %p169
      %p171 = scmp.ne.s32.totalorder %s163, %s165
      %p172 = scmp.eq.s32.totalorder %s31, 1
      %p173 = por %p171, %p172
      %p174 = scmp.ne.s32.totalorder %s165, %s166
      %p175 = scmp.eq.s32.totalorder %s31, 0
      %p176 = por %p174, %p175
      %p177 = scmp.ne.s32.totalorder %s165, %s166
      %p178 = scmp.eq.s32.totalorder %s32, 1
      %p179 = por %p177, %p178
      %p181 = scmp.ne.s32.totalorder %s166, %s180
      %p182 = scmp.eq.s32.totalorder %s32, 0
      %p183 = por %p181, %p182
      %s184 = ssub.s32 %s33, %s45
      %s185 = ssub.s32 %s34, %s41
      %s186 = sor.u32 %s184, %s185
      %p187 = scmp.eq.s32.totalorder %s186, 0
      %s189 = sadd.s32 %s188, 1
      %s190 = scalar_select %p187, %s188, %s189
      %p193 = pneg %p187
      %p194 = scmp.eq.s32.totalorder %s26, 1
      %p195 = por %p193, %p194
      %p196 = scmp.ne.s32.totalorder %s188, %s191
      %p197 = scmp.eq.s32.totalorder %s26, 0
      %p198 = por %p196, %p197
      %p199 = scmp.ne.s32.totalorder %s188, %s191
      %p200 = scmp.eq.s32.totalorder %s31, 1
      %p201 = por %p199, %p200
      %p202 = scmp.ne.s32.totalorder %s191, %s192
      %p203 = scmp.eq.s32.totalorder %s31, 0
      %p204 = por %p202, %p203
      %p205 = scmp.ne.s32.totalorder %s191, %s192
      %p206 = scmp.eq.s32.totalorder %s32, 1
      %p207 = por %p205, %p206
      %p209 = scmp.ne.s32.totalorder %s192, %s208
      %p210 = scmp.eq.s32.totalorder %s32, 0
      %p211 = por %p209, %p210
      %s212 = ssub.s32 %s33, %s45
      %s213 = ssub.s32 %s34, %s41
      %s214 = sor.u32 %s212, %s213
      %p215 = scmp.eq.s32.totalorder %s214, 0
      %s217 = sadd.s32 %s216, 1
      %s218 = scalar_select %p215, %s216, %s217
      %p221 = pneg %p215
      %p222 = scmp.eq.s32.totalorder %s26, 1
      %p223 = por %p221, %p222
      %p224 = scmp.ne.s32.totalorder %s216, %s219
      %p225 = scmp.eq.s32.totalorder %s26, 0
      %p226 = por %p224, %p225
      %p227 = scmp.ne.s32.totalorder %s216, %s219
      %p228 = scmp.eq.s32.totalorder %s31, 1
      %p229 = por %p227, %p228
      %p230 = scmp.ne.s32.totalorder %s219, %s220
      %p231 = scmp.eq.s32.totalorder %s31, 0
      %p232 = por %p230, %p231
      %p233 = scmp.ne.s32.totalorder %s219, %s220
      %p234 = scmp.eq.s32.totalorder %s32, 1
      %p235 = por %p233, %p234
      %p237 = scmp.ne.s32.totalorder %s220, %s236
      %p238 = scmp.eq.s32.totalorder %s32, 0
      %p239 = por %p237, %p238
      %p240 = scmp.le.s32.totalorder 1, %s26
      %p241 = scmp.lt.s32.totalorder %s26, 3
      %p242 = pnand %p240, %p241
      %p243 = pneg %p242
      // Predicated region
      $region9: #{tpu_custom_call.1} parent=5 // pred_check
        _
      $region10: #{tpu_custom_call.1} parent=5 // pred_check_branch
        %245 = sbr.rel (%p242) target = $region12
      $region11: #{tpu_custom_call.1} parent=5 // pred_region
        %s246 = ssub.s32 %s26, 1
        // Predicated region
        $region13: #{tpu_custom_call.1} parent=11 // pred_check
          %p247 = pneg %p113
        $region14: #{tpu_custom_call.1} parent=11 // pred_check_branch
          %249 = sbr.rel (%p247) target = $region16
        $region15: #{tpu_custom_call.1} parent=11 // pred_region
          _
        $region16: #{tpu_custom_call.1} parent=11 // pred_fallthru
          _
        // Predicated region
        $region17: #{tpu_custom_call.1} parent=11 // pred_check
          %p250 = pneg %p134
        $region18: #{tpu_custom_call.1} parent=11 // pred_check_branch
          %252 = sbr.rel (%p250) target = $region20
        $region19: #{tpu_custom_call.1} parent=11 // pred_region
          _
        $region20: #{tpu_custom_call.1} parent=11 // pred_fallthru
          _
        // Predicated region
        $region21: #{tpu_custom_call.1} parent=11 // pred_check
          %p253 = pneg %p155
        $region22: #{tpu_custom_call.1} parent=11 // pred_check_branch
          %255 = sbr.rel (%p253) target = $region24
        $region23: #{tpu_custom_call.1} parent=11 // pred_region
          _
        $region24: #{tpu_custom_call.1} parent=11 // pred_fallthru
          _
        // Predicated region
        $region25: #{tpu_custom_call.1} parent=11 // pred_check
          %p256 = pneg %p176
        $region26: #{tpu_custom_call.1} parent=11 // pred_check_branch
          %258 = sbr.rel (%p256) target = $region28
        $region27: #{tpu_custom_call.1} parent=11 // pred_region
          _
        $region28: #{tpu_custom_call.1} parent=11 // pred_fallthru
          _
      $region12: #{tpu_custom_call.1} parent=5 // pred_fallthru
        _
      %p259 = scmp.lt.s32.totalorder %s26, 2
      // Predicated region
      $region29: #{tpu_custom_call.1} parent=5 // pred_check
        %p260 = pneg %p259
      $region30: #{tpu_custom_call.1} parent=5 // pred_check_branch
        %262 = sbr.rel (%p260) target = $region32
      $region31: #{tpu_custom_call.1} parent=5 // pred_region
        // Predicated region
        $region33: #{tpu_custom_call.1} parent=31 // pred_check
          %p263 = pneg %p60
        $region34: #{tpu_custom_call.1} parent=31 // pred_check_branch
          %265 = sbr.rel (%p263) target = $region36
        $region35: #{tpu_custom_call.1} parent=31 // pred_region
          %s266 = sand.u32 %s50, 1
          %s267 = scalar_lea.sflag [#allocation4], %s266
          %s268 = sand.u32 %s50, 1
          %s269 = smul.addr %s268, 8
          %s270 = scalar_lea.vmem [#allocation3], %s269
          %s271 = smul.u32 2, %s34
          %273 = vsyncadd %s267, 0
          %s274 = smul.addr %s33, 2
          %s275 = sadd.s32 %s271, %s274
          %s276 = smul.addr %s275, 4
          %s277 = scalar_lea.hbm %s0, %s276
          %s279 = sshll.u32 %s277, 4
          %s280 = int_to_ptr.hbm [resolvable:$true] %s279
          %s281 = sshll.u32 %s270, 4
          %s282 = int_to_ptr.vmem [resolvable:$true] %s281
          %284 = dma.hbm_to_vmem [thread:$0]  %s280, 128, %s282, %s267
        $region36: #{tpu_custom_call.1} parent=31 // pred_fallthru
          _
        // Predicated region
        $region37: #{tpu_custom_call.1} parent=31 // pred_check
          %p285 = pneg %p86
        $region38: #{tpu_custom_call.1} parent=31 // pred_check_branch
          %287 = sbr.rel (%p285) target = $region40
        $region39: #{tpu_custom_call.1} parent=31 // pred_region
          %s288 = sand.u32 %s76, 1
          %s289 = scalar_lea.sflag [#allocation7], %s288
          %s290 = sand.u32 %s76, 1
          %s291 = smul.addr %s290, 8
          %s292 = scalar_lea.vmem [#allocation6], %s291
          %294 = vsyncadd %s289, 0
          %s295 = smul.addr %s33, 2
          %s296 = smul.addr %s295, 4
          %s297 = scalar_lea.hbm %s1, %s296
          %s299 = sshll.u32 %s297, 4
          %s300 = int_to_ptr.hbm [resolvable:$true] %s299
          %s301 = sshll.u32 %s292, 4
          %s302 = int_to_ptr.vmem [resolvable:$true] %s301
          %304 = dma.hbm_to_vmem [thread:$0]  %s300, 128, %s302, %s289
        $region40: #{tpu_custom_call.1} parent=31 // pred_fallthru
          _
      $region32: #{tpu_custom_call.1} parent=5 // pred_fallthru
        _
      %p305 = scmp.le.s32.totalorder 1, %s26
      %p306 = scmp.lt.s32.totalorder %s26, 3
      %p307 = pnand %p305, %p306
      %p308 = pneg %p307
      // Predicated region
      $region41: #{tpu_custom_call.1} parent=5 // pred_check
        _
      $region42: #{tpu_custom_call.1} parent=5 // pred_check_branch
        %310 = sbr.rel (%p307) target = $region44
      $region43: #{tpu_custom_call.1} parent=5 // pred_region
        %s311 = ssub.s32 %s26, 1
        %s312 = sand.u32 %s53, 1
        %s313 = scalar_lea.sflag [#allocation4], %s312
        %s314 = sand.u32 %s53, 1
        %s315 = smul.addr %s314, 8
        %s316 = scalar_lea.vmem [#allocation3], %s315
        // Predicated region
        $region45: #{tpu_custom_call.1} parent=43 // pred_check
          %p317 = pneg %p66
        $region46: #{tpu_custom_call.1} parent=43 // pred_check_branch
          %319 = sbr.rel (%p317) target = $region48
        $region47: #{tpu_custom_call.1} parent=43 // pred_region
          %321 = dma.done %s313, 128
        $region48: #{tpu_custom_call.1} parent=43 // pred_fallthru
          _
        %s322 = sand.u32 %s79, 1
        %s323 = scalar_lea.sflag [#allocation7], %s322
        %s324 = sand.u32 %s79, 1
        %s325 = smul.addr %s324, 8
        %s326 = scalar_lea.vmem [#allocation6], %s325
        // Predicated region
        $region49: #{tpu_custom_call.1} parent=43 // pred_check
          %p327 = pneg %p92
        $region50: #{tpu_custom_call.1} parent=43 // pred_check_branch
          %329 = sbr.rel (%p327) target = $region52
        $region51: #{tpu_custom_call.1} parent=43 // pred_region
          %331 = dma.done %s323, 128
        $region52: #{tpu_custom_call.1} parent=43 // pred_fallthru
          _
        %s332 = sand.u32 %s53, 1
        %s333 = scalar_lea.sflag [#allocation4], %s332
        %s334 = sand.u32 %s53, 1
        %s335 = smul.addr %s334, 8
        %s336 = scalar_lea.vmem [#allocation3], %s335
        %p337 = pneg %p66
        %p338 = pneg %p63
        %s339 = sand.u32 %s79, 1
        %s340 = scalar_lea.sflag [#allocation7], %s339
        %s341 = sand.u32 %s79, 1
        %s342 = smul.addr %s341, 8
        %s343 = scalar_lea.vmem [#allocation6], %s342
        %p344 = pneg %p92
        %p345 = pneg %p89
        %p346 = pneg %p113
        %p347 = pneg %p110
        %p348 = pneg %p134
        %p349 = pneg %p131
        %p350 = pneg %p155
        %p351 = pneg %p152
        %p352 = pneg %p176
        %p353 = pneg %p173
        %p354 = pneg %p204
        %p355 = pneg %p201
        %s356 = sand.u32 %s191, 1
        %s357 = scalar_lea.sflag [#allocation5], %s356
        %s358 = sand.u32 %s191, 1
        %s359 = smul.addr %s358, 8
        %s360 = scalar_lea.vmem [#allocation8], %s359
        %p361 = pneg %p232
        %p362 = pneg %p229
        %s363 = sand.u32 %s219, 1
        %s364 = scalar_lea.sflag [#allocation10], %s363
        %s365 = sand.u32 %s219, 1
        %s366 = smul.addr %s365, 2
        %s367 = scalar_lea.vmem [#allocation9], %s366
        %s368 = smul.u32 2, %s36
        %s369 = smul.u32 2, %s36
        %s370 = smul.u32 2, %s36
        %p371 = scmp.eq.s32.totalorder %s36, 0
        // Predicated region
        $region53: #{tpu_custom_call.1} parent=43 // pred_check
          %p372 = pneg %p371
        $region54: #{tpu_custom_call.1} parent=43 // pred_check_branch
          %374 = sbr.rel (%p372) target = $region56
        $region55: #{tpu_custom_call.1} parent=43 // pred_region
          %v375 = vld [vmem:[%s4] sm:$0x3]
          %v376 = vld [vmem:[%s326] sm:$0xff]
          %v377 = vld [vmem:[%s5] sm:$0x3]
          %379 = vset.pattern.permute.xlu0 0
          %380 = vperm.xlu0 %379, %v377
          %v381 = vpop.permute.xlu0 %380
          %384 = vst [vmem:[#allocation1] ss:$2 sm:$0xff] %v376
          %v385 = vld.sshfl [vmem:[#allocation1] sm:$0xff pattern:$0x75316420]
          %v386 = vld.sshfl [vmem:[#allocation1 + $0x8] sm:$0xff pattern:$0x75316420]
          %vm387 = vcmask 31744
          %v389 = vsel %vm387, %v375, 0
          %vm391 = vcmask 1043456
          %v392 = vsel %vm391, %v385, 0
          %v394 = vsel %vm391, %v386, 0
          %396 = vmatpush.msra.mxu0 0.0
          %397 = vmatpush.msra.mxu0 0.0
          %398 = vmatpush.msra.mxu0 0.0
          %399 = vmatpush.msra.mxu0 0.0
          %400 = vmatpush.msra.mxu0 0.0
          %401 = vmatpush.msra.mxu0 0.0
          %402 = vmatpush.msra.mxu0 0.0
          %403 = vmatpush.msra.mxu0 0.0
          %404 = vmatpush.msra.mxu0 0.0
          %405 = vmatpush.msra.mxu0 0.0
          %406 = vmatpush.msra.mxu0 0.0
          %407 = vmatpush.msra.mxu0 0.0
          %408 = vmatpush.msra.mxu0 0.0
          %409 = vmatpush.msra.mxu0 0.0
          %410 = vmatpush.msra.mxu0 0.0
          %411 = vmatpush.msra.mxu0 %v392
          %412 = vmatmul.f32.gmra.mxu0 %v389
          %v413 = vpop.f32.mrf.mxu0
          %v414 = vadd.f32 %v381, %v413
          %415 = vdwg.mxu0
          %416 = vmatpush.msra.mxu0 0.0
          %417 = vmatpush.msra.mxu0 0.0
          %418 = vmatpush.msra.mxu0 0.0
          %419 = vmatpush.msra.mxu0 0.0
          %420 = vmatpush.msra.mxu0 0.0
          %421 = vmatpush.msra.mxu0 0.0
          %422 = vmatpush.msra.mxu0 0.0
          %423 = vmatpush.msra.mxu0 0.0
          %424 = vmatpush.msra.mxu0 0.0
          %425 = vmatpush.msra.mxu0 0.0
          %426 = vmatpush.msra.mxu0 0.0
          %427 = vmatpush.msra.mxu0 0.0
          %428 = vmatpush.msra.mxu0 0.0
          %429 = vmatpush.msra.mxu0 0.0
          %430 = vmatpush.msra.mxu0 0.0
          %431 = vmatpush.msra.mxu0 %v394
          %432 = vmatmul.f32.gmra.mxu0 %v389
          %v433 = vpop.f32.mrf.mxu0
          %v434 = vadd.f32 %v381, %v433
          %435 = vdwg.mxu0
          %v438 = vrot.slane %v434, 6
          %vm439 = vcmask 1041408
          %v440 = vsel %vm439, %v414, %v438
          %442 = vst [vmem:[#allocation2] sm:$0xf] %v440
        $region56: #{tpu_custom_call.1} parent=43 // pred_fallthru
          _
        %v443 = vld [vmem:[%s316] sm:$0xff]
        %v444 = vld [vmem:[%s2] sm:$0x3]
        %v445 = vld [vmem:[%s3] sm:$0x3]
        %447 = vset.pattern.permute.xlu0 0
        %448 = vperm.xlu0 %447, %v445
        %v449 = vpop.permute.xlu0 %448
        %452 = vst [vmem:[#allocation1] ss:$2 sm:$0xff] %v443
        %v453 = vld.sshfl [vmem:[#allocation1] sm:$0xff pattern:$0x75316420]
        %v454 = vld.sshfl [vmem:[#allocation1 + $0x8] sm:$0xff pattern:$0x75316420]
        %vm455 = vcmask 31744
        %v457 = vsel %vm455, %v444, 0
        %vm459 = vcmask 1043456
        %v460 = vsel %vm459, %v453, 0
        %v462 = vsel %vm459, %v454, 0
        %464 = vmatpush.msra.mxu0 0.0
        %465 = vmatpush.msra.mxu0 0.0
        %466 = vmatpush.msra.mxu0 0.0
        %467 = vmatpush.msra.mxu0 0.0
        %468 = vmatpush.msra.mxu0 0.0
        %469 = vmatpush.msra.mxu0 0.0
        %470 = vmatpush.msra.mxu0 0.0
        %471 = vmatpush.msra.mxu0 0.0
        %472 = vmatpush.msra.mxu0 0.0
        %473 = vmatpush.msra.mxu0 0.0
        %474 = vmatpush.msra.mxu0 0.0
        %475 = vmatpush.msra.mxu0 0.0
        %476 = vmatpush.msra.mxu0 0.0
        %477 = vmatpush.msra.mxu0 0.0
        %478 = vmatpush.msra.mxu0 0.0
        %479 = vmatpush.msra.mxu0 %v460
        %480 = vmatmul.f32.gmra.mxu0 %v457
        %v481 = vpop.f32.mrf.mxu0
        %v482 = vadd.f32 %v449, %v481
        %483 = vdwg.mxu0
        %484 = vmatpush.msra.mxu0 0.0
        %485 = vmatpush.msra.mxu0 0.0
        %486 = vmatpush.msra.mxu0 0.0
        %487 = vmatpush.msra.mxu0 0.0
        %488 = vmatpush.msra.mxu0 0.0
        %489 = vmatpush.msra.mxu0 0.0
        %490 = vmatpush.msra.mxu0 0.0
        %491 = vmatpush.msra.mxu0 0.0
        %492 = vmatpush.msra.mxu0 0.0
        %493 = vmatpush.msra.mxu0 0.0
        %494 = vmatpush.msra.mxu0 0.0
        %495 = vmatpush.msra.mxu0 0.0
        %496 = vmatpush.msra.mxu0 0.0
        %497 = vmatpush.msra.mxu0 0.0
        %498 = vmatpush.msra.mxu0 0.0
        %499 = vmatpush.msra.mxu0 %v462
        %500 = vmatmul.f32.gmra.mxu0 %v457
        %v501 = vpop.f32.mrf.mxu0
        %v502 = vadd.f32 %v449, %v501
        %503 = vdwg.mxu0
        %v504 = vld [vmem:[#allocation2] sm:$0xf]
        %506 = vst [vmem:[#allocation1] ss:$4 sm:$0xff] %v504
        %v507 = vld.sshfl [vmem:[#allocation1] sm:$0xff pattern:$0x73625140]
        %v508 = vld.sshfl [vmem:[#allocation1 + $0x8] sm:$0xff pattern:$0x73625140]
        %511 = vxpose.xlu0.b32.start [1/16] %v507, 128
        %512 = vxpose.xlu0.b32.cont [2/16] 0.0, 128
        %513 = vxpose.xlu0.b32.cont [3/16] 0.0, 128
        %514 = vxpose.xlu0.b32.cont [4/16] 0.0, 128
        %515 = vxpose.xlu0.b32.cont [5/16] 0.0, 128
        %516 = vxpose.xlu0.b32.cont [6/16] 0.0, 128
        %517 = vxpose.xlu0.b32.cont [7/16] 0.0, 128
        %518 = vxpose.xlu0.b32.cont [8/16] 0.0, 128
        %519 = vxpose.xlu0.b32.cont [9/16] 0.0, 128
        %520 = vxpose.xlu0.b32.cont [10/16] 0.0, 128
        %521 = vxpose.xlu0.b32.cont [11/16] 0.0, 128
        %522 = vxpose.xlu0.b32.cont [12/16] 0.0, 128
        %523 = vxpose.xlu0.b32.cont [13/16] 0.0, 128
        %524 = vxpose.xlu0.b32.cont [14/16] 0.0, 128
        %525 = vxpose.xlu0.b32.cont [15/16] 0.0, 128
        %526 = vxpose.xlu0.b32.end [16/16] 0.0, 128
        %v527 = vpop.trf.xlu0
        %v528 = vpop.trf.xlu0
        %v529 = vpop.trf.xlu0
        %v530 = vpop.trf.xlu0
        %v531 = vpop.trf.xlu0
        %v532 = vpop.trf.xlu0
        %v533 = vpop.trf.xlu0
        %v534 = vpop.trf.xlu0
        %v535 = vpop.trf.xlu0
        %v536 = vpop.trf.xlu0
        %v537 = vpop.trf.xlu0
        %v538 = vpop.trf.xlu0
        %v539 = vpop.trf.xlu0
        %v540 = vpop.trf.xlu0
        %v541 = vpop.trf.xlu0
        %v542 = vpop.trf.xlu0
        %543 = vxpose.xlu0.b32.start [1/16] %v508, 128
        %544 = vxpose.xlu0.b32.cont [2/16] 0.0, 128
        %545 = vxpose.xlu0.b32.cont [3/16] 0.0, 128
        %546 = vxpose.xlu0.b32.cont [4/16] 0.0, 128
        %547 = vxpose.xlu0.b32.cont [5/16] 0.0, 128
        %548 = vxpose.xlu0.b32.cont [6/16] 0.0, 128
        %549 = vxpose.xlu0.b32.cont [7/16] 0.0, 128
        %550 = vxpose.xlu0.b32.cont [8/16] 0.0, 128
        %551 = vxpose.xlu0.b32.cont [9/16] 0.0, 128
        %552 = vxpose.xlu0.b32.cont [10/16] 0.0, 128
        %553 = vxpose.xlu0.b32.cont [11/16] 0.0, 128
        %554 = vxpose.xlu0.b32.cont [12/16] 0.0, 128
        %555 = vxpose.xlu0.b32.cont [13/16] 0.0, 128
        %556 = vxpose.xlu0.b32.cont [14/16] 0.0, 128
        %557 = vxpose.xlu0.b32.cont [15/16] 0.0, 128
        %558 = vxpose.xlu0.b32.end [16/16] 0.0, 128
        %v559 = vpop.trf.xlu0
        %v560 = vpop.trf.xlu0
        %v561 = vpop.trf.xlu0
        %v562 = vpop.trf.xlu0
        %v563 = vpop.trf.xlu0
        %v564 = vpop.trf.xlu0
        %v565 = vpop.trf.xlu0
        %v566 = vpop.trf.xlu0
        %v567 = vpop.trf.xlu0
        %v568 = vpop.trf.xlu0
        %v569 = vpop.trf.xlu0
        %v570 = vpop.trf.xlu0
        %v571 = vpop.trf.xlu0
        %v572 = vpop.trf.xlu0
        %v573 = vpop.trf.xlu0
        %v574 = vpop.trf.xlu0
        %vm575 = vcmask 15360
        %v577 = vsel %vm575, %v527, 0
        %v580 = vsel %vm575, %v528, 0
        %v583 = vsel %vm575, %v529, 0
        %v586 = vsel %vm575, %v530, 0
        %v589 = vsel %vm575, %v531, 0
        %v592 = vsel %vm575, %v532, 0
        %v595 = vsel %vm575, %v533, 0
        %v598 = vsel %vm575, %v534, 0
        %v601 = vsel %vm575, %v535, 0
        %v604 = vsel %vm575, %v536, 0
        %v607 = vsel %vm575, %v537, 0
        %v610 = vsel %vm575, %v538, 0
        %v613 = vsel %vm575, %v539, 0
        %v616 = vsel %vm575, %v540, 0
        %v619 = vsel %vm575, %v541, 0
        %v622 = vsel %vm575, %v542, 0
        %v625 = vsel %vm575, %v559, 0
        %v628 = vsel %vm575, %v560, 0
        %v631 = vsel %vm575, %v561, 0
        %v634 = vsel %vm575, %v562, 0
        %v637 = vsel %vm575, %v563, 0
        %v640 = vsel %vm575, %v564, 0
        %v643 = vsel %vm575, %v565, 0
        %v646 = vsel %vm575, %v566, 0
        %v649 = vsel %vm575, %v567, 0
        %v652 = vsel %vm575, %v568, 0
        %v655 = vsel %vm575, %v569, 0
        %v658 = vsel %vm575, %v570, 0
        %v661 = vsel %vm575, %v571, 0
        %v664 = vsel %vm575, %v572, 0
        %v667 = vsel %vm575, %v573, 0
        %v670 = vsel %vm575, %v574, 0
        %vm672 = vcmask 1041408
        %v674 = vsel %vm672, %v482, 0
        %v677 = vsel %vm672, %v502, 0
        %679 = vmatpush.msra.mxu0 0.0
        %680 = vmatpush.msra.mxu0 0.0
        %681 = vmatpush.msra.mxu0 0.0
        %682 = vmatpush.msra.mxu0 0.0
        %683 = vmatpush.msra.mxu0 0.0
        %684 = vmatpush.msra.mxu0 0.0
        %685 = vmatpush.msra.mxu0 0.0
        %686 = vmatpush.msra.mxu0 0.0
        %687 = vmatpush.msra.mxu0 0.0
        %688 = vmatpush.msra.mxu0 0.0
        %689 = vmatpush.msra.mxu0 0.0
        %690 = vmatpush.msra.mxu0 0.0
        %691 = vmatpush.msra.mxu0 0.0
        %692 = vmatpush.msra.mxu0 0.0
        %693 = vmatpush.msra.mxu0 0.0
        %694 = vmatpush.msra.mxu0 %v674
        %695 = vmatmul.f32.gmra.mxu0 %v577
        %v696 = vpop.f32.mrf.mxu0
        %v697 = vadd.f32 0.0, %v696
        %698 = vmatmul.f32.gmra.mxu0 %v580
        %v699 = vpop.f32.mrf.mxu0
        %v700 = vadd.f32 0.0, %v699
        %701 = vmatmul.f32.gmra.mxu0 %v583
        %v702 = vpop.f32.mrf.mxu0
        %v703 = vadd.f32 0.0, %v702
        %704 = vmatmul.f32.gmra.mxu0 %v586
        %v705 = vpop.f32.mrf.mxu0
        %v706 = vadd.f32 0.0, %v705
        %707 = vmatmul.f32.gmra.mxu0 %v589
        %v708 = vpop.f32.mrf.mxu0
        %v709 = vadd.f32 0.0, %v708
        %710 = vmatmul.f32.gmra.mxu0 %v592
        %v711 = vpop.f32.mrf.mxu0
        %v712 = vadd.f32 0.0, %v711
        %713 = vmatmul.f32.gmra.mxu0 %v595
        %v714 = vpop.f32.mrf.mxu0
        %v715 = vadd.f32 0.0, %v714
        %716 = vmatmul.f32.gmra.mxu0 %v598
        %v717 = vpop.f32.mrf.mxu0
        %v718 = vadd.f32 0.0, %v717
        %719 = vmatmul.f32.gmra.mxu0 %v601
        %v720 = vpop.f32.mrf.mxu0
        %v721 = vadd.f32 0.0, %v720
        %722 = vmatmul.f32.gmra.mxu0 %v604
        %v723 = vpop.f32.mrf.mxu0
        %v724 = vadd.f32 0.0, %v723
        %725 = vmatmul.f32.gmra.mxu0 %v607
        %v726 = vpop.f32.mrf.mxu0
        %v727 = vadd.f32 0.0, %v726
        %728 = vmatmul.f32.gmra.mxu0 %v610
        %v729 = vpop.f32.mrf.mxu0
        %v730 = vadd.f32 0.0, %v729
        %731 = vmatmul.f32.gmra.mxu0 %v613
        %v732 = vpop.f32.mrf.mxu0
        %v733 = vadd.f32 0.0, %v732
        %734 = vmatmul.f32.gmra.mxu0 %v616
        %v735 = vpop.f32.mrf.mxu0
        %v736 = vadd.f32 0.0, %v735
        %737 = vmatmul.f32.gmra.mxu0 %v619
        %v738 = vpop.f32.mrf.mxu0
        %v739 = vadd.f32 0.0, %v738
        %740 = vmatmul.f32.gmra.mxu0 %v622
        %v741 = vpop.f32.mrf.mxu0
        %v742 = vadd.f32 0.0, %v741
        %743 = vmatmul.f32.gmra.mxu0 %v625
        %v744 = vpop.f32.mrf.mxu0
        %v745 = vadd.f32 0.0, %v744
        %746 = vmatmul.f32.gmra.mxu0 %v628
        %v747 = vpop.f32.mrf.mxu0
        %v748 = vadd.f32 0.0, %v747
        %749 = vmatmul.f32.gmra.mxu0 %v631
        %v750 = vpop.f32.mrf.mxu0
        %v751 = vadd.f32 0.0, %v750
        %752 = vmatmul.f32.gmra.mxu0 %v634
        %v753 = vpop.f32.mrf.mxu0
        %v754 = vadd.f32 0.0, %v753
        %755 = vmatmul.f32.gmra.mxu0 %v637
        %v756 = vpop.f32.mrf.mxu0
        %v757 = vadd.f32 0.0, %v756
        %758 = vmatmul.f32.gmra.mxu0 %v640
        %v759 = vpop.f32.mrf.mxu0
        %v760 = vadd.f32 0.0, %v759
        %761 = vmatmul.f32.gmra.mxu0 %v643
        %v762 = vpop.f32.mrf.mxu0
        %v763 = vadd.f32 0.0, %v762
        %764 = vmatmul.f32.gmra.mxu0 %v646
        %v765 = vpop.f32.mrf.mxu0
        %v766 = vadd.f32 0.0, %v765
        %767 = vmatmul.f32.gmra.mxu0 %v649
        %v768 = vpop.f32.mrf.mxu0
        %v769 = vadd.f32 0.0, %v768
        %770 = vmatmul.f32.gmra.mxu0 %v652
        %v771 = vpop.f32.mrf.mxu0
        %v772 = vadd.f32 0.0, %v771
        %773 = vmatmul.f32.gmra.mxu0 %v655
        %v774 = vpop.f32.mrf.mxu0
        %v775 = vadd.f32 0.0, %v774
        %776 = vmatmul.f32.gmra.mxu0 %v658
        %v777 = vpop.f32.mrf.mxu0
        %v778 = vadd.f32 0.0, %v777
        %779 = vmatmul.f32.gmra.mxu0 %v661
        %v780 = vpop.f32.mrf.mxu0
        %v781 = vadd.f32 0.0, %v780
        %782 = vmatmul.f32.gmra.mxu0 %v664
        %v783 = vpop.f32.mrf.mxu0
        %v784 = vadd.f32 0.0, %v783
        %785 = vmatmul.f32.gmra.mxu0 %v667
        %v786 = vpop.f32.mrf.mxu0
        %v787 = vadd.f32 0.0, %v786
        %788 = vmatmul.f32.gmra.mxu0 %v670
        %v789 = vpop.f32.mrf.mxu0
        %v790 = vadd.f32 0.0, %v789
        %791 = vdwg.mxu0
        %792 = vmatpush.msra.mxu0 0.0
        %793 = vmatpush.msra.mxu0 0.0
        %794 = vmatpush.msra.mxu0 0.0
        %795 = vmatpush.msra.mxu0 0.0
        %796 = vmatpush.msra.mxu0 0.0
        %797 = vmatpush.msra.mxu0 0.0
        %798 = vmatpush.msra.mxu0 0.0
        %799 = vmatpush.msra.mxu0 0.0
        %800 = vmatpush.msra.mxu0 0.0
        %801 = vmatpush.msra.mxu0 0.0
        %802 = vmatpush.msra.mxu0 0.0
        %803 = vmatpush.msra.mxu0 0.0
        %804 = vmatpush.msra.mxu0 0.0
        %805 = vmatpush.msra.mxu0 0.0
        %806 = vmatpush.msra.mxu0 0.0
        %807 = vmatpush.msra.mxu0 %v677
        %808 = vmatmul.f32.gmra.mxu0 %v577
        %v809 = vpop.f32.mrf.mxu0
        %v810 = vadd.f32 0.0, %v809
        %811 = vmatmul.f32.gmra.mxu0 %v580
        %v812 = vpop.f32.mrf.mxu0
        %v813 = vadd.f32 0.0, %v812
        %814 = vmatmul.f32.gmra.mxu0 %v583
        %v815 = vpop.f32.mrf.mxu0
        %v816 = vadd.f32 0.0, %v815
        %817 = vmatmul.f32.gmra.mxu0 %v586
        %v818 = vpop.f32.mrf.mxu0
        %v819 = vadd.f32 0.0, %v818
        %820 = vmatmul.f32.gmra.mxu0 %v589
        %v821 = vpop.f32.mrf.mxu0
        %v822 = vadd.f32 0.0, %v821
        %823 = vmatmul.f32.gmra.mxu0 %v592
        %v824 = vpop.f32.mrf.mxu0
        %v825 = vadd.f32 0.0, %v824
        %826 = vmatmul.f32.gmra.mxu0 %v595
        %v827 = vpop.f32.mrf.mxu0
        %v828 = vadd.f32 0.0, %v827
        %829 = vmatmul.f32.gmra.mxu0 %v598
        %v830 = vpop.f32.mrf.mxu0
        %v831 = vadd.f32 0.0, %v830
        %832 = vmatmul.f32.gmra.mxu0 %v601
        %v833 = vpop.f32.mrf.mxu0
        %v834 = vadd.f32 0.0, %v833
        %835 = vmatmul.f32.gmra.mxu0 %v604
        %v836 = vpop.f32.mrf.mxu0
        %v837 = vadd.f32 0.0, %v836
        %838 = vmatmul.f32.gmra.mxu0 %v607
        %v839 = vpop.f32.mrf.mxu0
        %v840 = vadd.f32 0.0, %v839
        %841 = vmatmul.f32.gmra.mxu0 %v610
        %v842 = vpop.f32.mrf.mxu0
        %v843 = vadd.f32 0.0, %v842
        %844 = vmatmul.f32.gmra.mxu0 %v613
        %v845 = vpop.f32.mrf.mxu0
        %v846 = vadd.f32 0.0, %v845
        %847 = vmatmul.f32.gmra.mxu0 %v616
        %v848 = vpop.f32.mrf.mxu0
        %v849 = vadd.f32 0.0, %v848
        %850 = vmatmul.f32.gmra.mxu0 %v619
        %v851 = vpop.f32.mrf.mxu0
        %v852 = vadd.f32 0.0, %v851
        %853 = vmatmul.f32.gmra.mxu0 %v622
        %v854 = vpop.f32.mrf.mxu0
        %v855 = vadd.f32 0.0, %v854
        %856 = vmatmul.f32.gmra.mxu0 %v625
        %v857 = vpop.f32.mrf.mxu0
        %v858 = vadd.f32 0.0, %v857
        %859 = vmatmul.f32.gmra.mxu0 %v628
        %v860 = vpop.f32.mrf.mxu0
        %v861 = vadd.f32 0.0, %v860
        %862 = vmatmul.f32.gmra.mxu0 %v631
        %v863 = vpop.f32.mrf.mxu0
        %v864 = vadd.f32 0.0, %v863
        %865 = vmatmul.f32.gmra.mxu0 %v634
        %v866 = vpop.f32.mrf.mxu0
        %v867 = vadd.f32 0.0, %v866
        %868 = vmatmul.f32.gmra.mxu0 %v637
        %v869 = vpop.f32.mrf.mxu0
        %v870 = vadd.f32 0.0, %v869
        %871 = vmatmul.f32.gmra.mxu0 %v640
        %v872 = vpop.f32.mrf.mxu0
        %v873 = vadd.f32 0.0, %v872
        %874 = vmatmul.f32.gmra.mxu0 %v643
        %v875 = vpop.f32.mrf.mxu0
        %v876 = vadd.f32 0.0, %v875
        %877 = vmatmul.f32.gmra.mxu0 %v646
        %v878 = vpop.f32.mrf.mxu0
        %v879 = vadd.f32 0.0, %v878
        %880 = vmatmul.f32.gmra.mxu0 %v649
        %v881 = vpop.f32.mrf.mxu0
        %v882 = vadd.f32 0.0, %v881
        %883 = vmatmul.f32.gmra.mxu0 %v652
        %v884 = vpop.f32.mrf.mxu0
        %v885 = vadd.f32 0.0, %v884
        %886 = vmatmul.f32.gmra.mxu0 %v655
        %v887 = vpop.f32.mrf.mxu0
        %v888 = vadd.f32 0.0, %v887
        %889 = vmatmul.f32.gmra.mxu0 %v658
        %v890 = vpop.f32.mrf.mxu0
        %v891 = vadd.f32 0.0, %v890
        %892 = vmatmul.f32.gmra.mxu0 %v661
        %v893 = vpop.f32.mrf.mxu0
        %v894 = vadd.f32 0.0, %v893
        %895 = vmatmul.f32.gmra.mxu0 %v664
        %v896 = vpop.f32.mrf.mxu0
        %v897 = vadd.f32 0.0, %v896
        %898 = vmatmul.f32.gmra.mxu0 %v667
        %v899 = vpop.f32.mrf.mxu0
        %v900 = vadd.f32 0.0, %v899
        %901 = vmatmul.f32.gmra.mxu0 %v670
        %v902 = vpop.f32.mrf.mxu0
        %v903 = vadd.f32 0.0, %v902
        %904 = vdwg.mxu0
        %v905 = vmax.f32 %v697, %v703
        %v906 = vmax.f32 %v700, %v706
        %v907 = vmax.f32 %v905, %v709
        %v908 = vmax.f32 %v906, %v712
        %v909 = vmax.f32 %v907, %v715
        %v910 = vmax.f32 %v908, %v718
        %v911 = vmax.f32 %v909, %v721
        %v912 = vmax.f32 %v910, %v724
        %v913 = vmax.f32 %v911, %v727
        %v914 = vmax.f32 %v912, %v730
        %v915 = vmax.f32 %v913, %v733
        %v916 = vmax.f32 %v914, %v736
        %v917 = vmax.f32 %v915, %v739
        %v918 = vmax.f32 %v916, %v742
        %v919 = vmax.f32 %v917, %v745
        %v920 = vmax.f32 %v918, %v748
        %v921 = vmax.f32 %v919, %v751
        %v922 = vmax.f32 %v920, %v754
        %v923 = vmax.f32 %v921, %v757
        %v924 = vmax.f32 %v922, %v760
        %v925 = vmax.f32 %v923, %v763
        %v926 = vmax.f32 %v924, %v766
        %v927 = vmax.f32 %v925, %v769
        %v928 = vmax.f32 %v926, %v772
        %v929 = vmax.f32 %v927, %v775
        %v930 = vmax.f32 %v928, %v778
        %v931 = vmax.f32 %v929, %v781
        %v932 = vmax.f32 %v930, %v784
        %v933 = vmax.f32 %v931, %v787
        %v934 = vmax.f32 %v932, %v790
        %v935 = vmax.f32 %v933, %v934
        %v936 = vrot.slane %v935, 4
        %v937 = vmax.f32 %v935, %v936
        %v938 = vrot.slane %v937, 2
        %v939 = vmax.f32 %v937, %v938
        %v940 = vrot.slane %v939, 1
        %v941 = vmax.f32 %v939, %v940
        %v942 = vmax.f32 %v810, %v816
        %v943 = vmax.f32 %v813, %v819
        %v944 = vmax.f32 %v942, %v822
        %v945 = vmax.f32 %v943, %v825
        %v946 = vmax.f32 %v944, %v828
        %v947 = vmax.f32 %v945, %v831
        %v948 = vmax.f32 %v946, %v834
        %v949 = vmax.f32 %v947, %v837
        %v950 = vmax.f32 %v948, %v840
        %v951 = vmax.f32 %v949, %v843
        %v952 = vmax.f32 %v950, %v846
        %v953 = vmax.f32 %v951, %v849
        %v954 = vmax.f32 %v952, %v852
        %v955 = vmax.f32 %v953, %v855
        %v956 = vmax.f32 %v954, %v858
        %v957 = vmax.f32 %v955, %v861
        %v958 = vmax.f32 %v956, %v864
        %v959 = vmax.f32 %v957, %v867
        %v960 = vmax.f32 %v958, %v870
        %v961 = vmax.f32 %v959, %v873
        %v962 = vmax.f32 %v960, %v876
        %v963 = vmax.f32 %v961, %v879
        %v964 = vmax.f32 %v962, %v882
        %v965 = vmax.f32 %v963, %v885
        %v966 = vmax.f32 %v964, %v888
        %v967 = vmax.f32 %v965, %v891
        %v968 = vmax.f32 %v966, %v894
        %v969 = vmax.f32 %v967, %v897
        %v970 = vmax.f32 %v968, %v900
        %v971 = vmax.f32 %v969, %v903
        %v972 = vmax.f32 %v970, %v971
        %v973 = vrot.slane %v972, 4
        %v974 = vmax.f32 %v972, %v973
        %v975 = vrot.slane %v974, 2
        %v976 = vmax.f32 %v974, %v975
        %v977 = vrot.slane %v976, 1
        %v978 = vmax.f32 %v976, %v977
        %v979 = vmul.f32 %v941, 0.00390625
        %v980 = vmul.f32 %v978, 0.00390625
        %v981 = vadd.f32 %v979, 1.0
        %v982 = vadd.f32 %v980, 1.0
        %v985 = vrot.slane %v982, 4
        %v986 = vsel %vm459, %v981, %v985
        %v988 = vmul.f32 %v443, %v986
        %989 = vst [vmem:[%s360] sm:$0xff] %v988
        %v992 = vrot.slane %v980, 7
        %vm993 = vcmask 1040384
        %v994 = vsel %vm993, %v979, %v992
        %v996 = vlaneseq
        %vm997 = vcmp.ge.s32.totalorder %v996, 0
        %vm998 = vcmp.lt.s32.totalorder %v996, 256
        %vm999 = vmand %vm997, %vm998
        %1000 = vst.msk [vmem:[%s367] sm:$0x3] %vm999, %v994
        %s1001 = sand.u32 %s191, 1
        %s1002 = scalar_lea.sflag [#allocation5], %s1001
        %s1003 = sand.u32 %s191, 1
        %s1004 = smul.addr %s1003, 8
        %s1005 = scalar_lea.vmem [#allocation8], %s1004
        %s1006 = sand.u32 %s219, 1
        %s1007 = scalar_lea.sflag [#allocation10], %s1006
        %s1008 = sand.u32 %s219, 1
        %s1009 = smul.addr %s1008, 2
        %s1010 = scalar_lea.vmem [#allocation9], %s1009
        // Predicated region
        $region57: #{tpu_custom_call.1} parent=43 // pred_check
          %p1011 = pneg %p201
        $region58: #{tpu_custom_call.1} parent=43 // pred_check_branch
          %1013 = sbr.rel (%p1011) target = $region60
        $region59: #{tpu_custom_call.1} parent=43 // pred_region
          %s1014 = smul.u32 2, %s36
          %1016 = vsyncadd %s1002, 0
          %s1017 = smul.addr %s35, 2
          %s1018 = sadd.s32 %s1014, %s1017
          %s1019 = smul.addr %s1018, 4
          %s1020 = scalar_lea.hbm %s6, %s1019
          %s1022 = sshll.u32 %s1005, 4
          %s1023 = int_to_ptr.vmem [resolvable:$true] %s1022
          %s1024 = sshll.u32 %s1020, 4
          %s1025 = int_to_ptr.hbm [resolvable:$true] %s1024
          %1027 = dma.vmem_to_hbm [thread:$0]  %s1023, 128, %s1025, %s1002
        $region60: #{tpu_custom_call.1} parent=43 // pred_fallthru
          _
        // Predicated region
        $region61: #{tpu_custom_call.1} parent=43 // pred_check
          %p1028 = pneg %p229
        $region62: #{tpu_custom_call.1} parent=43 // pred_check_branch
          %1030 = sbr.rel (%p1028) target = $region64
        $region63: #{tpu_custom_call.1} parent=43 // pred_region
          %s1031 = smul.u32 2, %s36
          %1033 = vsyncadd %s1007, 0
          %s1034 = smul.addr %s35, 2
          %s1035 = sadd.s32 %s1031, %s1034
          %s1036 = scalar_lea.hbm %s7, %s1035
          %s1038 = sshll.u32 %s1010, 4
          %s1039 = int_to_ptr.vmem [resolvable:$true] %s1038
          %s1040 = sshll.u32 %s1036, 4
          %s1041 = int_to_ptr.hbm [resolvable:$true] %s1040
          %1043 = dma.vmem_to_hbm [thread:$0]  %s1039, 32, %s1041, %s1007
        $region64: #{tpu_custom_call.1} parent=43 // pred_fallthru
          _
      $region44: #{tpu_custom_call.1} parent=5 // pred_fallthru
        _
      %p1044 = scmp.le.s32.totalorder 2, %s26
      // Predicated region
      $region65: #{tpu_custom_call.1} parent=5 // pred_check
        %p1045 = pneg %p1044
      $region66: #{tpu_custom_call.1} parent=5 // pred_check_branch
        %1047 = sbr.rel (%p1045) target = $region68
      $region67: #{tpu_custom_call.1} parent=5 // pred_region
        %s1048 = ssub.s32 %s26, 2
        // Predicated region
        $region69: #{tpu_custom_call.1} parent=67 // pred_check
          %p1049 = pneg %p207
        $region70: #{tpu_custom_call.1} parent=67 // pred_check_branch
          %1051 = sbr.rel (%p1049) target = $region72
        $region71: #{tpu_custom_call.1} parent=67 // pred_region
          %s1052 = sand.u32 %s192, 1
          %s1053 = scalar_lea.sflag [#allocation5], %s1052
          %s1054 = sand.u32 %s192, 1
          %s1055 = smul.addr %s1054, 8
          %s1056 = scalar_lea.vmem [#allocation8], %s1055
          %1058 = dma.done %s1053, 128
        $region72: #{tpu_custom_call.1} parent=67 // pred_fallthru
          _
        // Predicated region
        $region73: #{tpu_custom_call.1} parent=67 // pred_check
          %p1059 = pneg %p235
        $region74: #{tpu_custom_call.1} parent=67 // pred_check_branch
          %1061 = sbr.rel (%p1059) target = $region76
        $region75: #{tpu_custom_call.1} parent=67 // pred_region
          %s1062 = sand.u32 %s220, 1
          %s1063 = scalar_lea.sflag [#allocation10], %s1062
          %s1064 = sand.u32 %s220, 1
          %s1065 = smul.addr %s1064, 2
          %s1066 = scalar_lea.vmem [#allocation9], %s1065
          %1068 = dma.done %s1063, 32
        $region76: #{tpu_custom_call.1} parent=67 // pred_fallthru
          _
      $region68: #{tpu_custom_call.1} parent=5 // pred_fallthru
        _
    $region6: #{tpu_custom_call.1} parent=1 // loop_footer
      %s30 = sadd.s32 1, %s26
    $region7: #{tpu_custom_call.1} parent=1 // loop_footer_branch
      %25 = sbr.rel target = $region3
    $region8: #{tpu_custom_call.1} parent=1 // loop_exit
      _
    %1069 = vsyncpa [#allocation4], 1
    %s1070 = scalar_lea.sflag [#allocation4], 1
    %1071 = vsyncpa %s1070, 1
    %1072 = vsyncpa [#allocation7], 1
    %s1073 = scalar_lea.sflag [#allocation7], 1
    %1074 = vsyncpa %s1073, 1
    %1075 = vsyncpa [#allocation5], 1
    %s1076 = scalar_lea.sflag [#allocation5], 1
    %1077 = vsyncpa %s1076, 1
    %1078 = vsyncpa [#allocation10], 1
    %s1079 = scalar_lea.sflag [#allocation10], 1
    %1080 = vsyncpa %s1079, 1

</llo_original>
